<compile_context>
chip_gen: v6e
topology: v6e:2x2x1
jax: 0.10.0
libtpu: 0.0.40
codegen_flags: <defaults>
</compile_context>

<pallas_src>
import functools

import jax
import jax.numpy as jnp
from jax.experimental import pallas as pl
from jax.experimental.pallas import tpu as pltpu


def _mlp_kernel(x1_ref, x2_ref,
                w1a_ref, w1b_ref, b1_ref,
                w2_ref, b2_ref,
                w3_ref, b3_ref,
                o_ref):
    # First layer: time-mean + concat + Linear collapses to two bf16 MXU dots
    # (weights were 1/T-scaled and row-replicated T times in the wrapper).
    h1 = (jnp.dot(x1_ref[...], w1a_ref[...], preferred_element_type=jnp.float32)
          + jnp.dot(x2_ref[...], w1b_ref[...], preferred_element_type=jnp.float32)
          + b1_ref[...])
    h1 = jnp.maximum(h1, 0.0)
    # TODO(synk): Dropout(dropout_rate_1) is identity at inference time.

    h2 = jnp.dot(h1, w2_ref[...], preferred_element_type=jnp.float32) + b2_ref[...]
    h2 = jnp.maximum(h2, 0.0)

    o_ref[...] = (jnp.dot(h2, w3_ref[...], preferred_element_type=jnp.float32)
                  + b3_ref[...]).astype(o_ref.dtype)


def _round_up(x, m):
    return ((x + m - 1) // m) * m


def _pad2d(a, rows, cols):
    return jnp.pad(a, ((0, rows - a.shape[0]), (0, cols - a.shape[1])))


def prepare_mlp_params(params, input_dims, timesteps, activation_dtype=jnp.bfloat16):
    """One-time weight prep (outside the per-call path): split w1 per modality,
    fold the 1/T mean, replicate T times along rows (so (B,T*D) @ w1a_rep ==
    mean_t(x) @ w1[:D]), zero-pad feature dims to multiples of 128, and cast
    the streamed-side first-layer weights to bf16."""
    D1, D2 = input_dims
    T1, T2 = timesteps
    H1 = params["w1"].shape[1]
    H2 = params["w2"].shape[1]
    OUT = params["w3"].shape[1]
    H1p, H2p, OUTp = _round_up(H1, 128), _round_up(H2, 128), _round_up(OUT, 128)

    w1a = jnp.tile(params["w1"][:D1] * (1.0 / T1), (T1, 1))          # (T1*D1, H1)
    w1b = jnp.tile(params["w1"][D1:D1 + D2] * (1.0 / T2), (T2, 1))   # (T2*D2, H1)
    return {
        "w1a": _pad2d(w1a, T1 * D1, H1p).astype(activation_dtype),
        "w1b": _pad2d(w1b, T2 * D2, H1p).astype(activation_dtype),
        "b1": _pad2d(params["b1"], 1, H1p),
        "w2": _pad2d(params["w2"], H1p, H2p),
        "b2": _pad2d(params["b2"], 1, H2p),
        "w3": _pad2d(params["w3"], H2p, OUTp),
        "b3": _pad2d(params["b3"], 1, OUTp),
    }


@functools.partial(jax.jit, static_argnames=("out_dim", "tb"))
def mlp_forward(modality_embedded, modality_float, prepped, *, out_dim, tb=512):
    """modality_embedded: (B, T1, D1) float32 (already embedded token modality)
       modality_float:    (B, T2, D2) float32
       prepped:           output of prepare_mlp_params()."""
    B, T1, D1 = modality_embedded.shape
    _, T2, D2 = modality_float.shape
    H1p = prepped["w1a"].shape[1]
    H2p = prepped["w2"].shape[1]
    OUTp = prepped["w3"].shape[1]
    act_dtype = prepped["w1a"].dtype

    # Fold the time axis into the contraction dim: contiguous (free) reshape to
    # (B, T*D) + bf16 cast of the streamed activations (f32 accumulation stays
    # in-kernel via preferred_element_type).
    x1 = modality_embedded.reshape(B, T1 * D1).astype(act_dtype)
    x2 = modality_float.reshape(B, T2 * D2).astype(act_dtype)

    # Batch tile: multiple of 8 (sublane), clamped for tiny batches; keep >= 2
    # grid steps when the batch allows it so both v7x TensorCores get work
    # from the "parallel" axis (no effect on single-TC v5e/v6e).
    tb = max(8, min(_round_up(tb, 8), _round_up(B, 8)))
    if B >= 16 and _round_up(B, tb) // tb < 2:
        tb = _round_up(max(8, _round_up(B, 8) // 2), 8)
    Bp = _round_up(B, tb)
    if Bp != B:
        x1 = jnp.pad(x1, ((0, Bp - B), (0, 0)))
        x2 = jnp.pad(x2, ((0, Bp - B), (0, 0)))

    def _resident(shape):
        # Constant index_map -> stays resident in VMEM across the grid.
        return pl.BlockSpec(shape, lambda i: (0, 0))

    out = pl.pallas_call(
        _mlp_kernel,
        out_shape=jax.ShapeDtypeStruct((Bp, OUTp), jnp.float32),
        grid=(Bp // tb,),
        in_specs=[
            pl.BlockSpec((tb, T1 * D1), lambda i: (i, 0)),   # lane-dense bf16 stream
            pl.BlockSpec((tb, T2 * D2), lambda i: (i, 0)),
            _resident((T1 * D1, H1p)),
            _resident((T2 * D2, H1p)),
            _resident((1, H1p)),
            _resident((H1p, H2p)),
            _resident((1, H2p)),
            _resident((H2p, OUTp)),
            _resident((1, OUTp)),
        ],
        out_specs=pl.BlockSpec((tb, OUTp), lambda i: (i, 0)),
        compiler_params=pltpu.CompilerParams(
            dimension_semantics=("parallel",),     # megacore sharding on v7x
            vmem_limit_bytes=32 * 1024 * 1024,     # safe on v5e/v6e/v7x; raise on v5e/v6e if needed
        ),
    )(x1, x2, prepped["w1a"], prepped["w1b"], prepped["b1"],
      prepped["w2"], prepped["b2"], prepped["w3"], prepped["b3"])

    return out[:B, :out_dim]


if __name__ == "__main__":
    # Small, MLP-consistent shapes.
    B, T = 2, 8
    vocab_size, emb_dim = 20, 16        # opt.lookup_table
    d2 = 32                             # second (float) modality feature dim
    input_dims = [emb_dim, d2]          # opt.input_dims -> sum = 48
    hidden_dim_1 = 32
    hidden_dim_2 = 32
    output_dim = 8

    key = jax.random.PRNGKey(0)
    k_emb, k_ids, k_m2, kw1, kb1, kw2, kb2, kw3, kb3 = jax.random.split(key, 9)

    lookup_table = jax.random.normal(k_emb, (vocab_size, emb_dim), dtype=jnp.float32)
    fan_in1 = sum(input_dims)
    params = {
        "w1": jax.random.normal(kw1, (fan_in1, hidden_dim_1), dtype=jnp.float32)
              * (1.0 / jnp.sqrt(fan_in1)),
        "b1": jax.random.normal(kb1, (1, hidden_dim_1), dtype=jnp.float32) * 0.01,
        "w2": jax.random.normal(kw2, (hidden_dim_1, hidden_dim_2), dtype=jnp.float32)
              * (1.0 / jnp.sqrt(hidden_dim_1)),
        "b2": jax.random.normal(kb2, (1, hidden_dim_2), dtype=jnp.float32) * 0.01,
        "w3": jax.random.normal(kw3, (hidden_dim_2, output_dim), dtype=jnp.float32)
              * (1.0 / jnp.sqrt(hidden_dim_2)),
        "b3": jax.random.normal(kb3, (1, output_dim), dtype=jnp.float32) * 0.01,
    }

    # Example inputs: one token-id modality (B, T) and one float modality (B, T, d2).
    ids = jax.random.randint(k_ids, (B, T), 0, vocab_size, dtype=jnp.int32)
    modality_float = jax.random.normal(k_m2, (B, T, d2), dtype=jnp.float32)

    # Embedding lookup (gather) in plain JAX, matching nn.Embedding.
    modality_embedded = lookup_table[ids]           # (B, T, emb_dim)

    # One-time weight prep (padding / split / 1/T fold / T-replication / bf16).
    prepped = prepare_mlp_params(params, input_dims, (T, T))

    out = mlp_forward(modality_embedded, modality_float, prepped, out_dim=output_dim)
    out = jax.block_until_ready(out)

    # Reference check in plain JAX (mean -> concat -> Linear/ReLU x2 -> Linear).
    avg = jnp.concatenate(
        [modality_embedded.mean(axis=1), modality_float.mean(axis=1)], axis=-1)
    h1 = jnp.maximum(avg @ params["w1"] + params["b1"], 0.0)
    h2 = jnp.maximum(h1 @ params["w2"] + params["b2"], 0.0)
    ref = h2 @ params["w3"] + params["b3"]

    assert out.shape == (B, output_dim)
    # bf16-streamed activations / first-layer weights -> ~1e-2 tolerance.
    assert jnp.allclose(out, ref, atol=1e-2, rtol=1e-2), \
        float(jnp.max(jnp.abs(out - ref)))

    print("KERNEL_OK")
</pallas_src>

<mosaic_0001>
module attributes {stable_mosaic.version = 11 : i64} {
  func.func @_mlp_kernel(%arg0: i32, %arg1: memref<8x128xbf16, #tpu.memory_space<vmem>>, %arg2: memref<8x256xbf16, #tpu.memory_space<vmem>>, %arg3: memref<128x128xbf16, #tpu.memory_space<vmem>>, %arg4: memref<256x128xbf16, #tpu.memory_space<vmem>>, %arg5: memref<1x128xf32, #tpu.memory_space<vmem>>, %arg6: memref<128x128xf32, #tpu.memory_space<vmem>>, %arg7: memref<1x128xf32, #tpu.memory_space<vmem>>, %arg8: memref<128x128xf32, #tpu.memory_space<vmem>>, %arg9: memref<1x128xf32, #tpu.memory_space<vmem>>, %arg10: memref<8x128xf32, #tpu.memory_space<vmem>>) attributes {dimension_semantics = [#tpu.dimension_semantics<parallel>], iteration_bounds = array<i64: 1>, scalar_prefetch = 0 : i64, scratch_operands = 0 : i64, tpu.core_type = #tpu.core_type<tc>, window_params = [{transform_indices = @transform_0, window_bounds = array<i64: 8, 128>}, {transform_indices = @transform_1, window_bounds = array<i64: 8, 256>}, {pipeline_mode = #tpu.pipeline_mode<synchronous>, transform_indices = @transform_2, window_bounds = array<i64: 128, 128>}, {pipeline_mode = #tpu.pipeline_mode<synchronous>, transform_indices = @transform_3, window_bounds = array<i64: 256, 128>}, {pipeline_mode = #tpu.pipeline_mode<synchronous>, transform_indices = @transform_4, window_bounds = array<i64: 1, 128>}, {pipeline_mode = #tpu.pipeline_mode<synchronous>, transform_indices = @transform_5, window_bounds = array<i64: 128, 128>}, {pipeline_mode = #tpu.pipeline_mode<synchronous>, transform_indices = @transform_6, window_bounds = array<i64: 1, 128>}, {pipeline_mode = #tpu.pipeline_mode<synchronous>, transform_indices = @transform_7, window_bounds = array<i64: 128, 128>}, {pipeline_mode = #tpu.pipeline_mode<synchronous>, transform_indices = @transform_8, window_bounds = array<i64: 1, 128>}, {transform_indices = @transform_9, window_bounds = array<i64: 8, 128>}]} {
    %c0 = arith.constant 0 : index
    %c0_0 = arith.constant 0 : index
    %0 = vector.load %arg1[%c0, %c0_0] : memref<8x128xbf16, #tpu.memory_space<vmem>>, vector<8x128xbf16>
    %c0_1 = arith.constant 0 : index
    %c0_2 = arith.constant 0 : index
    %1 = vector.load %arg3[%c0_1, %c0_2] : memref<128x128xbf16, #tpu.memory_space<vmem>>, vector<128x128xbf16>
    %cst = arith.constant dense<0.000000e+00> : vector<8x128xf32>
    %2 = tpu.matmul %0, %1, %cst {dimension_numbers = #tpu.dot_dimension_numbers<[1], [0], [0], [1], [0, 0, 1, 1], [], []>} : vector<8x128xbf16>, vector<128x128xbf16>, vector<8x128xf32> -> vector<8x128xf32>
    %c0_3 = arith.constant 0 : index
    %c0_4 = arith.constant 0 : index
    %3 = vector.load %arg2[%c0_3, %c0_4] : memref<8x256xbf16, #tpu.memory_space<vmem>>, vector<8x256xbf16>
    %c0_5 = arith.constant 0 : index
    %c0_6 = arith.constant 0 : index
    %4 = vector.load %arg4[%c0_5, %c0_6] : memref<256x128xbf16, #tpu.memory_space<vmem>>, vector<256x128xbf16>
    %cst_7 = arith.constant dense<0.000000e+00> : vector<8x128xf32>
    %5 = tpu.matmul %3, %4, %cst_7 {dimension_numbers = #tpu.dot_dimension_numbers<[1], [0], [0], [1], [0, 0, 1, 1], [], []>} : vector<8x256xbf16>, vector<256x128xbf16>, vector<8x128xf32> -> vector<8x128xf32>
    %6 = arith.addf %2, %5 : vector<8x128xf32>
    %c0_8 = arith.constant 0 : index
    %c0_9 = arith.constant 0 : index
    %7 = vector.load %arg5[%c0_8, %c0_9] : memref<1x128xf32, #tpu.memory_space<vmem>>, vector<1x128xf32>
    %8 = vector.broadcast %7 : vector<1x128xf32> to vector<8x128xf32>
    %9 = arith.addf %6, %8 : vector<8x128xf32>
    %cst_10 = arith.constant 0.000000e+00 : f32
    %10 = vector.broadcast %cst_10 : f32 to vector<8x128xf32>
    %11 = arith.maximumf %9, %10 : vector<8x128xf32>
    %c0_11 = arith.constant 0 : index
    %c0_12 = arith.constant 0 : index
    %12 = vector.load %arg6[%c0_11, %c0_12] : memref<128x128xf32, #tpu.memory_space<vmem>>, vector<128x128xf32>
    %cst_13 = arith.constant dense<0.000000e+00> : vector<8x128xf32>
    %13 = tpu.matmul %11, %12, %cst_13 {dimension_numbers = #tpu.dot_dimension_numbers<[1], [0], [0], [1], [0, 0, 1, 1], [], []>} : vector<8x128xf32>, vector<128x128xf32>, vector<8x128xf32> -> vector<8x128xf32>
    %c0_14 = arith.constant 0 : index
    %c0_15 = arith.constant 0 : index
    %14 = vector.load %arg7[%c0_14, %c0_15] : memref<1x128xf32, #tpu.memory_space<vmem>>, vector<1x128xf32>
    %15 = vector.broadcast %14 : vector<1x128xf32> to vector<8x128xf32>
    %16 = arith.addf %13, %15 : vector<8x128xf32>
    %cst_16 = arith.constant 0.000000e+00 : f32
    %17 = vector.broadcast %cst_16 : f32 to vector<8x128xf32>
    %18 = arith.maximumf %16, %17 : vector<8x128xf32>
    %c0_17 = arith.constant 0 : index
    %c0_18 = arith.constant 0 : index
    %19 = vector.load %arg8[%c0_17, %c0_18] : memref<128x128xf32, #tpu.memory_space<vmem>>, vector<128x128xf32>
    %cst_19 = arith.constant dense<0.000000e+00> : vector<8x128xf32>
    %20 = tpu.matmul %18, %19, %cst_19 {dimension_numbers = #tpu.dot_dimension_numbers<[1], [0], [0], [1], [0, 0, 1, 1], [], []>} : vector<8x128xf32>, vector<128x128xf32>, vector<8x128xf32> -> vector<8x128xf32>
    %c0_20 = arith.constant 0 : index
    %c0_21 = arith.constant 0 : index
    %21 = vector.load %arg9[%c0_20, %c0_21] : memref<1x128xf32, #tpu.memory_space<vmem>>, vector<1x128xf32>
    %22 = vector.broadcast %21 : vector<1x128xf32> to vector<8x128xf32>
    %23 = arith.addf %20, %22 : vector<8x128xf32>
    %c0_22 = arith.constant 0 : index
    %c0_23 = arith.constant 0 : index
    %24 = vector.load %arg10[%c0_22, %c0_23] : memref<8x128xf32, #tpu.memory_space<vmem>>, vector<8x128xf32>
    tpu.vector_store %arg10[%c0_22, %c0_23], %23 {strides = array<i32>} : memref<8x128xf32, #tpu.memory_space<vmem>>, vector<8x128xf32>,
    return
  }
  func.func @transform_0(%arg0: i32) -> (i32, i32) {
    %c0_i32 = arith.constant 0 : i32
    %c0_i32_0 = arith.constant 0 : i32
    return %arg0, %c0_i32 : i32, i32
  }
  func.func @transform_1(%arg0: i32) -> (i32, i32) {
    %c0_i32 = arith.constant 0 : i32
    %c0_i32_0 = arith.constant 0 : i32
    return %arg0, %c0_i32 : i32, i32
  }
  func.func @transform_2(%arg0: i32) -> (i32, i32) {
    %c0_i32 = arith.constant 0 : i32
    %c0_i32_0 = arith.constant 0 : i32
    %c0_i32_1 = arith.constant 0 : i32
    return %c0_i32, %c0_i32_0 : i32, i32
  }
  func.func @transform_3(%arg0: i32) -> (i32, i32) {
    %c0_i32 = arith.constant 0 : i32
    %c0_i32_0 = arith.constant 0 : i32
    %c0_i32_1 = arith.constant 0 : i32
    return %c0_i32, %c0_i32_0 : i32, i32
  }
  func.func @transform_4(%arg0: i32) -> (i32, i32) {
    %c0_i32 = arith.constant 0 : i32
    %c0_i32_0 = arith.constant 0 : i32
    %c0_i32_1 = arith.constant 0 : i32
    return %c0_i32, %c0_i32_0 : i32, i32
  }
  func.func @transform_5(%arg0: i32) -> (i32, i32) {
    %c0_i32 = arith.constant 0 : i32
    %c0_i32_0 = arith.constant 0 : i32
    %c0_i32_1 = arith.constant 0 : i32
    return %c0_i32, %c0_i32_0 : i32, i32
  }
  func.func @transform_6(%arg0: i32) -> (i32, i32) {
    %c0_i32 = arith.constant 0 : i32
    %c0_i32_0 = arith.constant 0 : i32
    %c0_i32_1 = arith.constant 0 : i32
    return %c0_i32, %c0_i32_0 : i32, i32
  }
  func.func @transform_7(%arg0: i32) -> (i32, i32) {
    %c0_i32 = arith.constant 0 : i32
    %c0_i32_0 = arith.constant 0 : i32
    %c0_i32_1 = arith.constant 0 : i32
    return %c0_i32, %c0_i32_0 : i32, i32
  }
  func.func @transform_8(%arg0: i32) -> (i32, i32) {
    %c0_i32 = arith.constant 0 : i32
    %c0_i32_0 = arith.constant 0 : i32
    %c0_i32_1 = arith.constant 0 : i32
    return %c0_i32, %c0_i32_0 : i32, i32
  }
  func.func @transform_9(%arg0: i32) -> (i32, i32) {
    %c0_i32 = arith.constant 0 : i32
    %c0_i32_0 = arith.constant 0 : i32
    return %arg0, %c0_i32 : i32, i32
  }
}

</mosaic_0001>

<llo_original>
// kernel: mlp_forward.1
$region0: #{mlp_forward.1}
  #allocation0 [shape = 'u32[]', space=smem, size = 0x4, offset = 0x4, fixed_abs, tag = 'smem constant byte address 0x4 - core index']
  #allocation1 [shape = 'u32[144,128]{1,0:T(1,128)}', space=vmem, size = 0x12000, scoped, tag = 'internal scratch']
  %s0 = inlined_call_operand.vmem [shape: bf16[8,128], index: 0, kind: input, shape index: {}]
  %s1 = inlined_call_operand.vmem [shape: bf16[8,256], index: 1, kind: input, shape index: {}]
  %s2 = inlined_call_operand.vmem [shape: bf16[128,128], index: 2, kind: input, shape index: {}]
  %s3 = inlined_call_operand.hbm [shape: bf16[256,128], index: 3, kind: input, shape index: {}]
  %s4 = inlined_call_operand.vmem [shape: f32[1,128], index: 4, kind: input, shape index: {}]
  %s5 = inlined_call_operand.hbm [shape: f32[128,128], index: 5, kind: input, shape index: {}]
  %s6 = inlined_call_operand.vmem [shape: f32[1,128], index: 6, kind: input, shape index: {}]
  %s7 = inlined_call_operand.hbm [shape: f32[128,128], index: 7, kind: input, shape index: {}]
  %s8 = inlined_call_operand.vmem [shape: f32[1,128], index: 8, kind: input, shape index: {}]
  %s9 = inlined_call_operand.vmem [shape: f32[8,128], index: 9, kind: output, shape index: {}]
  %s10 = sld [smem:[#allocation0]]
  $region58: #{mlp_forward.1} parent=0
    _
  %s12 = ssub.s32 1, %s10
  %s13 = scalar_select 0, %s12, %s10
  $region1: #{mlp_forward.1} parent=0
    #allocation2 [shape = 'u8[65536]{0}', space=vmem, size = 0x10000, scoped, tag = 'input window, operand 3, single buffered']
    #allocation3 [shape = 's32[1]{0}', space=sflag, size = 0x4, scoped, tag = 'scoped memory for mlp_forward.1']
    #allocation4 [shape = 'u8[65536]{0}', space=vmem, size = 0x10000, scoped, tag = 'input window, operand 5, single buffered']
    #allocation5 [shape = 's32[1]{0}', space=sflag, size = 0x4, scoped, tag = 'scoped memory for mlp_forward.1']
    #allocation6 [shape = 'u8[65536]{0}', space=vmem, size = 0x10000, scoped, tag = 'input window, operand 7, single buffered']
    %14 = vsyncpa [#allocation3], 0
    %15 = vsyncpa [#allocation5], 0
    // Predicated region
    $region2: #{mlp_forward.1} parent=1 // pred_check
      _
    $region3: #{mlp_forward.1} parent=1 // pred_check_branch
      %17 = sbr.rel (0) target = $region5
    $region4: #{mlp_forward.1} parent=1 // pred_region
      _
    $region5: #{mlp_forward.1} parent=1 // pred_fallthru
      _
    // Predicated region
    $region6: #{mlp_forward.1} parent=1 // pred_check
      _
    $region7: #{mlp_forward.1} parent=1 // pred_check_branch
      %19 = sbr.rel (0) target = $region9
    $region8: #{mlp_forward.1} parent=1 // pred_region
      _
    $region9: #{mlp_forward.1} parent=1 // pred_fallthru
      _
    // Predicated region
    $region10: #{mlp_forward.1} parent=1 // pred_check
      _
    $region11: #{mlp_forward.1} parent=1 // pred_check_branch
      %21 = sbr.rel (0) target = $region13
    $region12: #{mlp_forward.1} parent=1 // pred_region
      _
    $region13: #{mlp_forward.1} parent=1 // pred_fallthru
      _
    // Predicated region
    $region14: #{mlp_forward.1} parent=1 // pred_check
      _
    $region15: #{mlp_forward.1} parent=1 // pred_check_branch
      %23 = sbr.rel (0) target = $region17
    $region16: #{mlp_forward.1} parent=1 // pred_region
      %s25 = ssub.s32 2048, 2048
      %26 = vsyncadd [#allocation3], %s25
      %s27 = sshll.u32 [#allocation2], 4
      %s28 = int_to_ptr.vmem [resolvable:$true] %s27
      %33 = dma.hbm_to_vmem [thread:$0]  %s3, 2048, %s28, [#allocation3], 64, 64, 4
    $region17: #{mlp_forward.1} parent=1 // pred_fallthru
      _
    // Predicated region
    $region18: #{mlp_forward.1} parent=1 // pred_check
      _
    $region19: #{mlp_forward.1} parent=1 // pred_check_branch
      %35 = sbr.rel (0) target = $region21
    $region20: #{mlp_forward.1} parent=1 // pred_region
      _
    $region21: #{mlp_forward.1} parent=1 // pred_fallthru
      _
    // Predicated region
    $region22: #{mlp_forward.1} parent=1 // pred_check
      _
    $region23: #{mlp_forward.1} parent=1 // pred_check_branch
      %37 = sbr.rel (0) target = $region25
    $region24: #{mlp_forward.1} parent=1 // pred_region
      %s39 = ssub.s32 2048, 2048
      %40 = vsyncadd [#allocation5], %s39
      %s41 = sshll.u32 [#allocation4], 4
      %s42 = int_to_ptr.vmem [resolvable:$true] %s41
      %47 = dma.hbm_to_vmem [thread:$0]  %s5, 2048, %s42, [#allocation5], 128, 128, 8
    $region25: #{mlp_forward.1} parent=1 // pred_fallthru
      _
    // Predicated region
    $region26: #{mlp_forward.1} parent=1 // pred_check
      _
    $region27: #{mlp_forward.1} parent=1 // pred_check_branch
      %49 = sbr.rel (0) target = $region29
    $region28: #{mlp_forward.1} parent=1 // pred_region
      _
    $region29: #{mlp_forward.1} parent=1 // pred_fallthru
      _
    // Predicated region
    $region30: #{mlp_forward.1} parent=1 // pred_check
      _
    $region31: #{mlp_forward.1} parent=1 // pred_check_branch
      %51 = sbr.rel (0) target = $region33
    $region32: #{mlp_forward.1} parent=1 // pred_region
      %s53 = ssub.s32 2048, 2048
      %54 = vsyncadd [#allocation5], %s53
      %s55 = sshll.u32 [#allocation6], 4
      %s56 = int_to_ptr.vmem [resolvable:$true] %s55
      %61 = dma.hbm_to_vmem [thread:$0]  %s7, 2048, %s56, [#allocation5], 128, 128, 8
    $region33: #{mlp_forward.1} parent=1 // pred_fallthru
      _
    // Predicated region
    $region34: #{mlp_forward.1} parent=1 // pred_check
      _
    $region35: #{mlp_forward.1} parent=1 // pred_check_branch
      %63 = sbr.rel (0) target = $region37
    $region36: #{mlp_forward.1} parent=1 // pred_region
      _
    $region37: #{mlp_forward.1} parent=1 // pred_fallthru
      _
    // Predicated region
    $region38: #{mlp_forward.1} parent=1 // pred_check
      _
    $region39: #{mlp_forward.1} parent=1 // pred_check_branch
      %65 = sbr.rel (0) target = $region41
    $region40: #{mlp_forward.1} parent=1 // pred_region
      %66 = dma.done [#allocation3], 2048
    $region41: #{mlp_forward.1} parent=1 // pred_fallthru
      _
    // Predicated region
    $region42: #{mlp_forward.1} parent=1 // pred_check
      _
    $region43: #{mlp_forward.1} parent=1 // pred_check_branch
      %68 = sbr.rel (0) target = $region45
    $region44: #{mlp_forward.1} parent=1 // pred_region
      %69 = dma.done [#allocation5], 2048
    $region45: #{mlp_forward.1} parent=1 // pred_fallthru
      _
    // Predicated region
    $region46: #{mlp_forward.1} parent=1 // pred_check
      _
    $region47: #{mlp_forward.1} parent=1 // pred_check_branch
      %71 = sbr.rel (0) target = $region49
    $region48: #{mlp_forward.1} parent=1 // pred_region
      %72 = dma.done [#allocation5], 2048
    $region49: #{mlp_forward.1} parent=1 // pred_fallthru
      _
    %v74 = vld [vmem:[%s0] sm:$0xf]
    %v75 = vld [vmem:[%s2] sm:$0xf]
    %v76 = vld [vmem:[%s2 + $0x4] sm:$0xf]
    %v77 = vld [vmem:[%s2 + $0x8] sm:$0xf]
    %v78 = vld [vmem:[%s2 + $0xc] sm:$0xf]
    %v79 = vld [vmem:[%s2 + $0x10] sm:$0xf]
    %v80 = vld [vmem:[%s2 + $0x14] sm:$0xf]
    %v81 = vld [vmem:[%s2 + $0x18] sm:$0xf]
    %v82 = vld [vmem:[%s2 + $0x1c] sm:$0xf]
    %v83 = vld [vmem:[%s2 + $0x20] sm:$0xf]
    %v84 = vld [vmem:[%s2 + $0x24] sm:$0xf]
    %v85 = vld [vmem:[%s2 + $0x28] sm:$0xf]
    %v86 = vld [vmem:[%s2 + $0x2c] sm:$0xf]
    %v87 = vld [vmem:[%s2 + $0x30] sm:$0xf]
    %v88 = vld [vmem:[%s2 + $0x34] sm:$0xf]
    %v89 = vld [vmem:[%s2 + $0x38] sm:$0xf]
    %v90 = vld [vmem:[%s2 + $0x3c] sm:$0xf]
    %v91 = vld [vmem:[%s1] sm:$0xff]
    %v92 = vld [vmem:[#allocation2] sm:$0xf]
    %v93 = vld [vmem:[#allocation2 + $0x4] sm:$0xf]
    %v94 = vld [vmem:[#allocation2 + $0x8] sm:$0xf]
    %v95 = vld [vmem:[#allocation2 + $0xc] sm:$0xf]
    %v96 = vld [vmem:[#allocation2 + $0x10] sm:$0xf]
    %v97 = vld [vmem:[#allocation2 + $0x14] sm:$0xf]
    %v98 = vld [vmem:[#allocation2 + $0x18] sm:$0xf]
    %v99 = vld [vmem:[#allocation2 + $0x1c] sm:$0xf]
    %v100 = vld [vmem:[#allocation2 + $0x20] sm:$0xf]
    %v101 = vld [vmem:[#allocation2 + $0x24] sm:$0xf]
    %v102 = vld [vmem:[#allocation2 + $0x28] sm:$0xf]
    %v103 = vld [vmem:[#allocation2 + $0x2c] sm:$0xf]
    %v104 = vld [vmem:[#allocation2 + $0x30] sm:$0xf]
    %v105 = vld [vmem:[#allocation2 + $0x34] sm:$0xf]
    %v106 = vld [vmem:[#allocation2 + $0x38] sm:$0xf]
    %v107 = vld [vmem:[#allocation2 + $0x3c] sm:$0xf]
    %v108 = vld [vmem:[#allocation2 + $0x40] sm:$0xf]
    %v109 = vld [vmem:[#allocation2 + $0x44] sm:$0xf]
    %v110 = vld [vmem:[#allocation2 + $0x48] sm:$0xf]
    %v111 = vld [vmem:[#allocation2 + $0x4c] sm:$0xf]
    %v112 = vld [vmem:[#allocation2 + $0x50] sm:$0xf]
    %v113 = vld [vmem:[#allocation2 + $0x54] sm:$0xf]
    %v114 = vld [vmem:[#allocation2 + $0x58] sm:$0xf]
    %v115 = vld [vmem:[#allocation2 + $0x5c] sm:$0xf]
    %v116 = vld [vmem:[#allocation2 + $0x60] sm:$0xf]
    %v117 = vld [vmem:[#allocation2 + $0x64] sm:$0xf]
    %v118 = vld [vmem:[#allocation2 + $0x68] sm:$0xf]
    %v119 = vld [vmem:[#allocation2 + $0x6c] sm:$0xf]
    %v120 = vld [vmem:[#allocation2 + $0x70] sm:$0xf]
    %v121 = vld [vmem:[#allocation2 + $0x74] sm:$0xf]
    %v122 = vld [vmem:[#allocation2 + $0x78] sm:$0xf]
    %v123 = vld [vmem:[#allocation2 + $0x7c] sm:$0xf]
    %v125 = vunpack.c.l.b16 %v91
    %v126 = vunpack.c.h.b16 %v91
    %v127 = vpack.c.b16 %v125, %v125
    %v128 = vpack.c.b16 %v126, %v126
    %v163 = vunpack.c.l.b16 %v92
    %v164 = vunpack.c.l.b16 %v93
    %v165 = vunpack.c.l.b16 %v94
    %v166 = vunpack.c.l.b16 %v95
    %v167 = vunpack.c.l.b16 %v96
    %v168 = vunpack.c.l.b16 %v97
    %v169 = vunpack.c.l.b16 %v98
    %v170 = vunpack.c.l.b16 %v99
    %v171 = vunpack.c.l.b16 %v100
    %v172 = vunpack.c.l.b16 %v101
    %v173 = vunpack.c.l.b16 %v102
    %v174 = vunpack.c.l.b16 %v103
    %v175 = vunpack.c.l.b16 %v104
    %v176 = vunpack.c.l.b16 %v105
    %v177 = vunpack.c.l.b16 %v106
    %v178 = vunpack.c.l.b16 %v107
    %v179 = vunpack.c.l.b16 %v108
    %v180 = vunpack.c.l.b16 %v109
    %v181 = vunpack.c.l.b16 %v110
    %v182 = vunpack.c.l.b16 %v111
    %v183 = vunpack.c.l.b16 %v112
    %v184 = vunpack.c.l.b16 %v113
    %v185 = vunpack.c.l.b16 %v114
    %v186 = vunpack.c.l.b16 %v115
    %v187 = vunpack.c.l.b16 %v116
    %v188 = vunpack.c.l.b16 %v117
    %v189 = vunpack.c.l.b16 %v118
    %v190 = vunpack.c.l.b16 %v119
    %v191 = vunpack.c.l.b16 %v120
    %v192 = vunpack.c.l.b16 %v121
    %v193 = vunpack.c.l.b16 %v122
    %v194 = vunpack.c.l.b16 %v123
    %v195 = vpack.c.b16 %v164, %v163
    %v196 = vpack.c.b16 %v166, %v165
    %v197 = vpack.c.b16 %v168, %v167
    %v198 = vpack.c.b16 %v170, %v169
    %v199 = vpack.c.b16 %v172, %v171
    %v200 = vpack.c.b16 %v174, %v173
    %v201 = vpack.c.b16 %v176, %v175
    %v202 = vpack.c.b16 %v178, %v177
    %v203 = vpack.c.b16 %v180, %v179
    %v204 = vpack.c.b16 %v182, %v181
    %v205 = vpack.c.b16 %v184, %v183
    %v206 = vpack.c.b16 %v186, %v185
    %v207 = vpack.c.b16 %v188, %v187
    %v208 = vpack.c.b16 %v190, %v189
    %v209 = vpack.c.b16 %v192, %v191
    %v210 = vpack.c.b16 %v194, %v193
    %227 = vmatprep.subr.bf16.mxu0 0
    %228 = vmatpush1.bf16.msra.mxu0 %v202
    %229 = vmatprep.subr.bf16.mxu0 0
    %230 = vmatpush1.bf16.msra.mxu0 %v201
    %231 = vmatprep.subr.bf16.mxu0 0
    %232 = vmatpush1.bf16.msra.mxu0 %v200
    %233 = vmatprep.subr.bf16.mxu0 0
    %234 = vmatpush1.bf16.msra.mxu0 %v199
    %235 = vmatprep.subr.bf16.mxu0 0
    %236 = vmatpush1.bf16.msra.mxu0 %v198
    %237 = vmatprep.subr.bf16.mxu0 0
    %238 = vmatpush1.bf16.msra.mxu0 %v197
    %239 = vmatprep.subr.bf16.mxu0 0
    %240 = vmatpush1.bf16.msra.mxu0 %v196
    %241 = vmatprep.subr.bf16.mxu0 0
    %242 = vmatpush1.bf16.msra.mxu0 %v195
    %243 = vmatprep.subr.bf16.mxu0 0
    %244 = vmatpush2.bf16.msra.mxu0 %v210
    %245 = vmatprep.subr.bf16.mxu0 0
    %246 = vmatpush2.bf16.msra.mxu0 %v209
    %247 = vmatprep.subr.bf16.mxu0 0
    %248 = vmatpush2.bf16.msra.mxu0 %v208
    %249 = vmatprep.subr.bf16.mxu0 0
    %250 = vmatpush2.bf16.msra.mxu0 %v207
    %251 = vmatprep.subr.bf16.mxu0 0
    %252 = vmatpush2.bf16.msra.mxu0 %v206
    %253 = vmatprep.subr.bf16.mxu0 0
    %254 = vmatpush2.bf16.msra.mxu0 %v205
    %255 = vmatprep.subr.bf16.mxu0 0
    %256 = vmatpush2.bf16.msra.mxu0 %v204
    %257 = vmatprep.subr.bf16.mxu0 0
    %258 = vmatpush2.bf16.msra.mxu0 %v203
    %259 = vmatprep.mubr.bf16.mxu0 %v128
    %260 = vmatmul.mubr.bf16.gmra.mxu0 %v127
    %v261 = vpop.f32.mrf.mxu0
    %v262 = vadd.f32 0.0, %v261
    %v263 = vpop.f32.mrf.mxu0
    %v264 = vpop.f32.mrf.mxu0
    %v265 = vpop.f32.mrf.mxu0
    %266 = vdwg.mxu0
    %v283 = vunpack.c.l.b16 %v75
    %v284 = vunpack.c.l.b16 %v76
    %v285 = vunpack.c.l.b16 %v77
    %v286 = vunpack.c.l.b16 %v78
    %v287 = vunpack.c.l.b16 %v79
    %v288 = vunpack.c.l.b16 %v80
    %v289 = vunpack.c.l.b16 %v81
    %v290 = vunpack.c.l.b16 %v82
    %v291 = vunpack.c.l.b16 %v83
    %v292 = vunpack.c.l.b16 %v84
    %v293 = vunpack.c.l.b16 %v85
    %v294 = vunpack.c.l.b16 %v86
    %v295 = vunpack.c.l.b16 %v87
    %v296 = vunpack.c.l.b16 %v88
    %v297 = vunpack.c.l.b16 %v89
    %v298 = vunpack.c.l.b16 %v90
    %v299 = vpack.c.b16 %v284, %v283
    %v300 = vpack.c.b16 %v286, %v285
    %v301 = vpack.c.b16 %v288, %v287
    %v302 = vpack.c.b16 %v290, %v289
    %v303 = vpack.c.b16 %v292, %v291
    %v304 = vpack.c.b16 %v294, %v293
    %v305 = vpack.c.b16 %v296, %v295
    %v306 = vpack.c.b16 %v298, %v297
    %315 = vmatprep.subr.bf16.mxu0 0
    %316 = vmatpush1.bf16.msra.mxu0 %v306
    %317 = vmatprep.subr.bf16.mxu0 0
    %318 = vmatpush1.bf16.msra.mxu0 %v305
    %319 = vmatprep.subr.bf16.mxu0 0
    %320 = vmatpush1.bf16.msra.mxu0 %v304
    %321 = vmatprep.subr.bf16.mxu0 0
    %322 = vmatpush1.bf16.msra.mxu0 %v303
    %323 = vmatprep.subr.bf16.mxu0 0
    %324 = vmatpush1.bf16.msra.mxu0 %v302
    %325 = vmatprep.subr.bf16.mxu0 0
    %326 = vmatpush1.bf16.msra.mxu0 %v301
    %327 = vmatprep.subr.bf16.mxu0 0
    %328 = vmatpush1.bf16.msra.mxu0 %v300
    %329 = vmatprep.subr.bf16.mxu0 0
    %330 = vmatpush1.bf16.msra.mxu0 %v299
    %331 = vmatprep.subr.bf16.mxu0 0
    %332 = vmatpush2.bf16.msra.mxu0 0
    %333 = vmatprep.subr.bf16.mxu0 0
    %334 = vmatpush2.bf16.msra.mxu0 0
    %335 = vmatprep.subr.bf16.mxu0 0
    %336 = vmatpush2.bf16.msra.mxu0 0
    %337 = vmatprep.subr.bf16.mxu0 0
    %338 = vmatpush2.bf16.msra.mxu0 0
    %339 = vmatprep.subr.bf16.mxu0 0
    %340 = vmatpush2.bf16.msra.mxu0 0
    %341 = vmatprep.subr.bf16.mxu0 0
    %342 = vmatpush2.bf16.msra.mxu0 0
    %343 = vmatprep.subr.bf16.mxu0 0
    %344 = vmatpush2.bf16.msra.mxu0 0
    %345 = vmatprep.subr.bf16.mxu0 0
    %346 = vmatpush2.bf16.msra.mxu0 0
    %347 = vmatprep.mubr.bf16.mxu0 0
    %348 = vmatmul.mubr.bf16.gmra.mxu0 %v74
    %v349 = vpop.f32.mrf.mxu0
    %v350 = vadd.f32 %v262, %v349
    %v351 = vpop.f32.mrf.mxu0
    %v352 = vpop.f32.mrf.mxu0
    %v353 = vpop.f32.mrf.mxu0
    %354 = vdwg.mxu0
    %v355 = vld [vmem:[%s4] sm:$0x1]
    %v357 = vlaneseq
    %v358 = vshrl.u32 %v357, 7
    %v359 = vsub.s32 0, %v358
    %v360 = vrot.slane %v355, %v359
    %v362 = vadd.f32 %v350, %v360
    %v363 = vmax.f32 %v362, 0.0
    %v364 = vld [vmem:[#allocation4] sm:$0xff]
    %v365 = vld [vmem:[#allocation4 + $0x8] sm:$0xff]
    %v366 = vld [vmem:[#allocation4 + $0x10] sm:$0xff]
    %v367 = vld [vmem:[#allocation4 + $0x18] sm:$0xff]
    %v368 = vld [vmem:[#allocation4 + $0x20] sm:$0xff]
    %v369 = vld [vmem:[#allocation4 + $0x28] sm:$0xff]
    %v370 = vld [vmem:[#allocation4 + $0x30] sm:$0xff]
    %v371 = vld [vmem:[#allocation4 + $0x38] sm:$0xff]
    %v372 = vld [vmem:[#allocation4 + $0x40] sm:$0xff]
    %v373 = vld [vmem:[#allocation4 + $0x48] sm:$0xff]
    %v374 = vld [vmem:[#allocation4 + $0x50] sm:$0xff]
    %v375 = vld [vmem:[#allocation4 + $0x58] sm:$0xff]
    %v376 = vld [vmem:[#allocation4 + $0x60] sm:$0xff]
    %v377 = vld [vmem:[#allocation4 + $0x68] sm:$0xff]
    %v378 = vld [vmem:[#allocation4 + $0x70] sm:$0xff]
    %v379 = vld [vmem:[#allocation4 + $0x78] sm:$0xff]
    %v380 = vld [vmem:[%s6] sm:$0x1]
    %v382 = vlaneseq
    %v383 = vshrl.u32 %v382, 7
    %v384 = vsub.s32 0, %v383
    %v385 = vrot.slane %v380, %v384
    %387 = vmatprep.subr.mxu0 0.0
    %388 = vmatpush1.msra.mxu0 %v379
    %389 = vmatprep.subr.mxu0 0.0
    %390 = vmatpush1.msra.mxu0 %v378
    %391 = vmatprep.subr.mxu0 0.0
    %392 = vmatpush1.msra.mxu0 %v377
    %393 = vmatprep.subr.mxu0 0.0
    %394 = vmatpush1.msra.mxu0 %v376
    %395 = vmatprep.subr.mxu0 0.0
    %396 = vmatpush1.msra.mxu0 %v375
    %397 = vmatprep.subr.mxu0 0.0
    %398 = vmatpush1.msra.mxu0 %v374
    %399 = vmatprep.subr.mxu0 0.0
    %400 = vmatpush1.msra.mxu0 %v373
    %401 = vmatprep.subr.mxu0 0.0
    %402 = vmatpush1.msra.mxu0 %v372
    %403 = vmatprep.subr.mxu0 0.0
    %404 = vmatpush1.msra.mxu0 %v371
    %405 = vmatprep.subr.mxu0 0.0
    %406 = vmatpush1.msra.mxu0 %v370
    %407 = vmatprep.subr.mxu0 0.0
    %408 = vmatpush1.msra.mxu0 %v369
    %409 = vmatprep.subr.mxu0 0.0
    %410 = vmatpush1.msra.mxu0 %v368
    %411 = vmatprep.subr.mxu0 0.0
    %412 = vmatpush1.msra.mxu0 %v367
    %413 = vmatprep.subr.mxu0 0.0
    %414 = vmatpush1.msra.mxu0 %v366
    %415 = vmatprep.subr.mxu0 0.0
    %416 = vmatpush1.msra.mxu0 %v365
    %417 = vmatprep.subr.mxu0 0.0
    %418 = vmatpush1.msra.mxu0 %v364
    %419 = vmatprep.subr.mxu0 0.0
    %420 = vmatpush2.msra.mxu0 0.0
    %421 = vmatprep.subr.mxu0 0.0
    %422 = vmatpush2.msra.mxu0 0.0
    %423 = vmatprep.subr.mxu0 0.0
    %424 = vmatpush2.msra.mxu0 0.0
    %425 = vmatprep.subr.mxu0 0.0
    %426 = vmatpush2.msra.mxu0 0.0
    %427 = vmatprep.subr.mxu0 0.0
    %428 = vmatpush2.msra.mxu0 0.0
    %429 = vmatprep.subr.mxu0 0.0
    %430 = vmatpush2.msra.mxu0 0.0
    %431 = vmatprep.subr.mxu0 0.0
    %432 = vmatpush2.msra.mxu0 0.0
    %433 = vmatprep.subr.mxu0 0.0
    %434 = vmatpush2.msra.mxu0 0.0
    %435 = vmatprep.subr.mxu0 0.0
    %436 = vmatpush2.msra.mxu0 0.0
    %437 = vmatprep.subr.mxu0 0.0
    %438 = vmatpush2.msra.mxu0 0.0
    %439 = vmatprep.subr.mxu0 0.0
    %440 = vmatpush2.msra.mxu0 0.0
    %441 = vmatprep.subr.mxu0 0.0
    %442 = vmatpush2.msra.mxu0 0.0
    %443 = vmatprep.subr.mxu0 0.0
    %444 = vmatpush2.msra.mxu0 0.0
    %445 = vmatprep.subr.mxu0 0.0
    %446 = vmatpush2.msra.mxu0 0.0
    %447 = vmatprep.subr.mxu0 0.0
    %448 = vmatpush2.msra.mxu0 0.0
    %449 = vmatprep.subr.mxu0 0.0
    %450 = vmatpush2.msra.mxu0 0.0
    %451 = vmatprep.mubr.f32.mxu0 0.0
    %452 = vmatmul.mubr.f32.gmra.mxu0 %v363
    %v453 = vpop.f32.mrf.mxu0
    %v454 = vadd.f32 %v385, %v453
    %v455 = vpop.f32.mrf.mxu0
    %456 = vdwg.mxu0
    %v457 = vmax.f32 %v454, 0.0
    %v458 = vld [vmem:[#allocation6] sm:$0xff]
    %v459 = vld [vmem:[#allocation6 + $0x8] sm:$0xff]
    %v460 = vld [vmem:[#allocation6 + $0x10] sm:$0xff]
    %v461 = vld [vmem:[#allocation6 + $0x18] sm:$0xff]
    %v462 = vld [vmem:[#allocation6 + $0x20] sm:$0xff]
    %v463 = vld [vmem:[#allocation6 + $0x28] sm:$0xff]
    %v464 = vld [vmem:[#allocation6 + $0x30] sm:$0xff]
    %v465 = vld [vmem:[#allocation6 + $0x38] sm:$0xff]
    %v466 = vld [vmem:[#allocation6 + $0x40] sm:$0xff]
    %v467 = vld [vmem:[#allocation6 + $0x48] sm:$0xff]
    %v468 = vld [vmem:[#allocation6 + $0x50] sm:$0xff]
    %v469 = vld [vmem:[#allocation6 + $0x58] sm:$0xff]
    %v470 = vld [vmem:[#allocation6 + $0x60] sm:$0xff]
    %v471 = vld [vmem:[#allocation6 + $0x68] sm:$0xff]
    %v472 = vld [vmem:[#allocation6 + $0x70] sm:$0xff]
    %v473 = vld [vmem:[#allocation6 + $0x78] sm:$0xff]
    %v474 = vld [vmem:[%s8] sm:$0x1]
    %v476 = vlaneseq
    %v477 = vshrl.u32 %v476, 7
    %v478 = vsub.s32 0, %v477
    %v479 = vrot.slane %v474, %v478
    %481 = vmatprep.subr.mxu0 0.0
    %482 = vmatpush1.msra.mxu0 %v473
    %483 = vmatprep.subr.mxu0 0.0
    %484 = vmatpush1.msra.mxu0 %v472
    %485 = vmatprep.subr.mxu0 0.0
    %486 = vmatpush1.msra.mxu0 %v471
    %487 = vmatprep.subr.mxu0 0.0
    %488 = vmatpush1.msra.mxu0 %v470
    %489 = vmatprep.subr.mxu0 0.0
    %490 = vmatpush1.msra.mxu0 %v469
    %491 = vmatprep.subr.mxu0 0.0
    %492 = vmatpush1.msra.mxu0 %v468
    %493 = vmatprep.subr.mxu0 0.0
    %494 = vmatpush1.msra.mxu0 %v467
    %495 = vmatprep.subr.mxu0 0.0
    %496 = vmatpush1.msra.mxu0 %v466
    %497 = vmatprep.subr.mxu0 0.0
    %498 = vmatpush1.msra.mxu0 %v465
    %499 = vmatprep.subr.mxu0 0.0
    %500 = vmatpush1.msra.mxu0 %v464
    %501 = vmatprep.subr.mxu0 0.0
    %502 = vmatpush1.msra.mxu0 %v463
    %503 = vmatprep.subr.mxu0 0.0
    %504 = vmatpush1.msra.mxu0 %v462
    %505 = vmatprep.subr.mxu0 0.0
    %506 = vmatpush1.msra.mxu0 %v461
    %507 = vmatprep.subr.mxu0 0.0
    %508 = vmatpush1.msra.mxu0 %v460
    %509 = vmatprep.subr.mxu0 0.0
    %510 = vmatpush1.msra.mxu0 %v459
    %511 = vmatprep.subr.mxu0 0.0
    %512 = vmatpush1.msra.mxu0 %v458
    %513 = vmatprep.subr.mxu0 0.0
    %514 = vmatpush2.msra.mxu0 0.0
    %515 = vmatprep.subr.mxu0 0.0
    %516 = vmatpush2.msra.mxu0 0.0
    %517 = vmatprep.subr.mxu0 0.0
    %518 = vmatpush2.msra.mxu0 0.0
    %519 = vmatprep.subr.mxu0 0.0
    %520 = vmatpush2.msra.mxu0 0.0
    %521 = vmatprep.subr.mxu0 0.0
    %522 = vmatpush2.msra.mxu0 0.0
    %523 = vmatprep.subr.mxu0 0.0
    %524 = vmatpush2.msra.mxu0 0.0
    %525 = vmatprep.subr.mxu0 0.0
    %526 = vmatpush2.msra.mxu0 0.0
    %527 = vmatprep.subr.mxu0 0.0
    %528 = vmatpush2.msra.mxu0 0.0
    %529 = vmatprep.subr.mxu0 0.0
    %530 = vmatpush2.msra.mxu0 0.0
    %531 = vmatprep.subr.mxu0 0.0
    %532 = vmatpush2.msra.mxu0 0.0
    %533 = vmatprep.subr.mxu0 0.0
    %534 = vmatpush2.msra.mxu0 0.0
    %535 = vmatprep.subr.mxu0 0.0
    %536 = vmatpush2.msra.mxu0 0.0
    %537 = vmatprep.subr.mxu0 0.0
    %538 = vmatpush2.msra.mxu0 0.0
    %539 = vmatprep.subr.mxu0 0.0
    %540 = vmatpush2.msra.mxu0 0.0
    %541 = vmatprep.subr.mxu0 0.0
    %542 = vmatpush2.msra.mxu0 0.0
    %543 = vmatprep.subr.mxu0 0.0
    %544 = vmatpush2.msra.mxu0 0.0
    %545 = vmatprep.mubr.f32.mxu0 0.0
    %546 = vmatmul.mubr.f32.gmra.mxu0 %v457
    %v547 = vpop.f32.mrf.mxu0
    %v548 = vadd.f32 %v479, %v547
    %v549 = vpop.f32.mrf.mxu0
    %550 = vdwg.mxu0
    %551 = vst [vmem:[%s9] sm:$0xff] %v548
    // Predicated region
    $region50: #{mlp_forward.1} parent=1 // pred_check
      _
    $region51: #{mlp_forward.1} parent=1 // pred_check_branch
      %553 = sbr.rel (0) target = $region53
    $region52: #{mlp_forward.1} parent=1 // pred_region
      _
    $region53: #{mlp_forward.1} parent=1 // pred_fallthru
      _
    // Predicated region
    $region54: #{mlp_forward.1} parent=1 // pred_check
      _
    $region55: #{mlp_forward.1} parent=1 // pred_check_branch
      %555 = sbr.rel (0) target = $region57
    $region56: #{mlp_forward.1} parent=1 // pred_region
      _
    $region57: #{mlp_forward.1} parent=1 // pred_fallthru
      _
    %556 = vsyncpa [#allocation3], 1
    %557 = vsyncpa [#allocation5], 1

</llo_original>
